<compile_context>
chip_gen: v7x
topology: tpu7x:2x2x1
jax: 0.10.0
libtpu: 0.0.40
codegen_flags: <defaults>
</compile_context>

<pallas_src>
import functools

import jax
import jax.numpy as jnp
from jax import lax
from jax.experimental import pallas as pl
from jax.experimental.pallas import tpu as pltpu


def fused_causal_mha_kernel(x_ref, wqkv_ref, o_ref, *, B, T, H, d_out):
    """One step: all batches, all heads.

    x_ref:    (B*T, d_in)        MXU operand dtype (f32 or bf16)
    wqkv_ref: (d_in, 3*H*d_out)  [Wq*scale | Wk | Wv], heads concatenated per block
    o_ref:    (B, T, H*d_out)    lane-dense concatenated head outputs
    """
    HD = H * d_out
    x = x_ref[...]                                       # (B*T, d_in)

    # One fused QKV projection for all heads (single MXU push/pop stream),
    # f32 accumulation regardless of operand dtype.
    qkv = jnp.dot(x, wqkv_ref[...],
                  preferred_element_type=jnp.float32)    # (B*T, 3*HD) f32

    # Split Q/K/V and restore the batch dim (leading-dim split: cheap).
    q = qkv[:, 0 * HD:1 * HD].reshape(B, T, HD)
    k = qkv[:, 1 * HD:2 * HD].reshape(B, T, HD)
    v = qkv[:, 2 * HD:3 * HD].reshape(B, T, HD)

    # Additive causal bias, built once and reused by every head (vadd instead
    # of a per-element vselect; exp(-1e30 - m) underflows to exactly 0).
    row = lax.broadcasted_iota(jnp.int32, (T, T), 0)
    col = lax.broadcasted_iota(jnp.int32, (T, T), 1)
    bias = jnp.where(col > row, jnp.float32(-1e30), jnp.float32(0.0))  # (T, T)
    bias = bias[None]                                    # (1, T, T)

    # Static per-head loop (H is tiny).  At this toy size the d_out-wide slices
    # stay inside one 128-lane tile; at production sizes make H*d_out a
    # multiple of 128 so they are tile-aligned and free.
    ctxs = []
    for h in range(H):
        lo = h * d_out
        qh = q[:, :, lo:lo + d_out]                      # (B, T, d_out) f32
        kh = k[:, :, lo:lo + d_out]
        vh = v[:, :, lo:lo + d_out]

        # scores = qh @ kh^T, batched over B only (single-batch-dim dot_general).
        s = jnp.einsum('bqd,bkd->bqk', qh, kh,
                       preferred_element_type=jnp.float32)          # (B, T, T)
        s = s + bias                                     # causal mask (additive)

        # Numerically-stable softmax over keys (scale already folded into Wq).
        m = jnp.max(s, axis=-1, keepdims=True)
        p = jnp.exp(s - m)
        denom = jnp.sum(p, axis=-1, keepdims=True)       # >= 1 (diag unmasked)
        r = pl.reciprocal(denom, approx=True)            # EUP vrcp (free slot)
        r = r * (2.0 - denom * r)                        # 1 Newton step -> ~f32 exact
        attn = p * r
        # TODO(synk): nn.Dropout on attention weights omitted (eval-mode semantics).

        ctxs.append(jnp.einsum('bqk,bkd->bqd', attn, vh,
                               preferred_element_type=jnp.float32))  # (B, T, d_out)

    # Single lane-dense store of the concatenated head contexts.
    o_ref[...] = jnp.concatenate(ctxs, axis=-1).astype(o_ref.dtype)


def multi_head_attention_wrapper(x, wq, wk, wv, *, mxu_dtype=None):
    """x: [B, T, d_in]; wq/wk/wv: [H, d_in, d_out] -> [B, T, H*d_out].

    mxu_dtype: dtype fed to the MXU for the QKV projection (e.g. jnp.bfloat16).
    Accumulation and softmax math stay f32; output dtype matches x.
    """
    B, T, d_in = x.shape
    H, _, d_out = wq.shape
    HD = H * d_out
    if mxu_dtype is None:
        mxu_dtype = x.dtype

    # Heads concatenated along the output dim: slab[:, h*d_out:(h+1)*d_out] == w[h],
    # so x @ slab yields per-head projections already in torch.cat(..., -1) order.
    def cat_heads(w):
        return jnp.transpose(w, (1, 0, 2)).reshape(d_in, HD).astype(jnp.float32)

    # Fold 1/sqrt(d_out) into Wq in f32 BEFORE any downcast (avoids extra
    # weight rounding when mxu_dtype is bf16), then fuse Q|K|V into one slab.
    scale = 1.0 / jnp.sqrt(jnp.float32(d_out))
    wqkv = jnp.concatenate(
        [cat_heads(wq) * scale, cat_heads(wk), cat_heads(wv)], axis=-1)
    wqkv = wqkv.astype(mxu_dtype)                        # (d_in, 3*HD)

    # Collapse batch into the matmul M dim (M = B*T): one kernel step total.
    x2 = x.reshape(B * T, d_in).astype(mxu_dtype)

    kernel = functools.partial(fused_causal_mha_kernel,
                               B=B, T=T, H=H, d_out=d_out)

    itemsize = lambda dt: jnp.dtype(dt).itemsize
    cost = pl.CostEstimate(
        flops=2 * B * T * d_in * 3 * HD + 4 * B * H * T * T * d_out,
        transcendentals=B * H * T * T,
        bytes_accessed=(B * T * d_in * itemsize(mxu_dtype)
                        + d_in * 3 * HD * itemsize(mxu_dtype)
                        + B * T * HD * itemsize(x.dtype)),
    )

    return pl.pallas_call(
        kernel,
        out_shape=jax.ShapeDtypeStruct((B, T, HD), x.dtype),
        grid_spec=pltpu.PrefetchScalarGridSpec(
            num_scalar_prefetch=0,
            grid=(1,),                                   # single step: no per-step overhead
            in_specs=[
                pl.BlockSpec((B * T, d_in), lambda i: (0, 0)),
                # Weight slab: whole thing, constant block index (VMEM-resident).
                # (With a 1-step grid, extra buffering is moot; at realistic sizes
                #  use pipeline_mode=pl.Buffered(1) here to avoid double-buffering
                #  never-refetched weights.)
                pl.BlockSpec((d_in, 3 * HD), lambda i: (0, 0)),
            ],
            out_specs=pl.BlockSpec((B, T, HD), lambda i: (0, 0, 0)),
        ),
        compiler_params=pltpu.CompilerParams(
            dimension_semantics=("arbitrary",),
            vmem_limit_bytes=32 * 1024 * 1024),
        cost_estimate=cost,
    )(x2, wqkv)


def _reference(x, wq, wk, wv):
    """Plain-JAX reference of the PyTorch forward (eval mode)."""
    H, d_in, d_out = wq.shape
    outs = []
    for h in range(H):
        q = x @ wq[h]
        k = x @ wk[h]
        v = x @ wv[h]
        s = jnp.einsum("btd,bsd->bts", q, k) / jnp.sqrt(jnp.float32(d_out))
        T = s.shape[-1]
        mask = jnp.triu(jnp.ones((T, T), jnp.bool_), k=1)
        s = jnp.where(mask[None], -jnp.inf, s)
        w = jax.nn.softmax(s, axis=-1)
        outs.append(jnp.einsum("bts,bsd->btd", w, v))
    return jnp.concatenate(outs, axis=-1)


if __name__ == "__main__":
    # Small deterministic config implied by the module:
    #   batch=2, context_length=8 (seq), d_in=32, d_out=16, num_heads=2
    B, T, d_in, d_out, H = 2, 8, 32, 16, 2

    key = jax.random.PRNGKey(0)
    kx, kq, kk, kv = jax.random.split(key, 4)
    x = jax.random.normal(kx, (B, T, d_in), dtype=jnp.float32)
    # nn.Linear-style init (uniform in [-1/sqrt(d_in), 1/sqrt(d_in)]), stored
    # pre-transposed as [H, d_in, d_out] so the kernel computes x @ W directly.
    bound = 1.0 / jnp.sqrt(jnp.float32(d_in))
    wq = jax.random.uniform(kq, (H, d_in, d_out), jnp.float32, -bound, bound)
    wk = jax.random.uniform(kk, (H, d_in, d_out), jnp.float32, -bound, bound)
    wv = jax.random.uniform(kv, (H, d_in, d_out), jnp.float32, -bound, bound)

    ref = _reference(x, wq, wk, wv)

    # f32 MXU-operand path: bit-for-bit faithful to the PyTorch module.
    out = jax.block_until_ready(
        multi_head_attention_wrapper(x, wq, wk, wv, mxu_dtype=jnp.float32))
    assert out.shape == (B, T, H * d_out), out.shape
    assert jnp.allclose(out, ref, atol=1e-5, rtol=1e-5), "f32 mismatch vs reference"

    # bf16 MXU-operand path (perf-recommended on v5e/v6e/v7x); f32 accumulation
    # and f32 softmax, so only the projection rounding differs from reference.
    out_bf16 = jax.block_until_ready(
        multi_head_attention_wrapper(x, wq, wk, wv, mxu_dtype=jnp.bfloat16))
    assert out_bf16.shape == (B, T, H * d_out), out_bf16.shape
    assert out_bf16.dtype == x.dtype
    assert jnp.allclose(out_bf16, ref, atol=7.5e-2, rtol=7.5e-2), \
        "bf16 path mismatch vs reference"

    print("KERNEL_OK")
</pallas_src>

<mosaic_0001>
module attributes {stable_mosaic.version = 11 : i64} {
  func.func @fused_causal_mha_kernel(%arg0: i32, %arg1: memref<16x32xf32, #tpu.memory_space<vmem>>, %arg2: memref<32x96xf32, #tpu.memory_space<vmem>>, %arg3: memref<2x8x32xf32, #tpu.memory_space<vmem>>) attributes {dimension_semantics = [#tpu.dimension_semantics<arbitrary>], iteration_bounds = array<i64: 1>, scalar_prefetch = 0 : i64, scratch_operands = 0 : i64, tpu.core_type = #tpu.core_type<tc>, window_params = [{pipeline_mode = #tpu.pipeline_mode<synchronous>, transform_indices = @transform_0, window_bounds = array<i64: 16, 32>}, {pipeline_mode = #tpu.pipeline_mode<synchronous>, transform_indices = @transform_1, window_bounds = array<i64: 32, 96>}, {pipeline_mode = #tpu.pipeline_mode<synchronous>, transform_indices = @transform_2, window_bounds = array<i64: 2, 8, 32>}]} {
    %c0 = arith.constant 0 : index
    %c0_0 = arith.constant 0 : index
    %0 = vector.load %arg1[%c0, %c0_0] : memref<16x32xf32, #tpu.memory_space<vmem>>, vector<16x32xf32>
    %c0_1 = arith.constant 0 : index
    %c0_2 = arith.constant 0 : index
    %1 = vector.load %arg2[%c0_1, %c0_2] : memref<32x96xf32, #tpu.memory_space<vmem>>, vector<32x96xf32>
    %cst = arith.constant dense<0.000000e+00> : vector<16x96xf32>
    %2 = tpu.matmul %0, %1, %cst {dimension_numbers = #tpu.dot_dimension_numbers<[1], [0], [0], [1], [0, 0, 1, 1], [], []>} : vector<16x32xf32>, vector<32x96xf32>, vector<16x96xf32> -> vector<16x96xf32>
    %3 = vector.extract_strided_slice %2 {offsets = [0, 0], sizes = [16, 32], strides = [1, 1]} : vector<16x96xf32> to vector<16x32xf32>
    %4 = vector.shape_cast %3 : vector<16x32xf32> to vector<2x8x32xf32>
    %5 = vector.extract_strided_slice %2 {offsets = [0, 32], sizes = [16, 32], strides = [1, 1]} : vector<16x96xf32> to vector<16x32xf32>
    %6 = vector.shape_cast %5 : vector<16x32xf32> to vector<2x8x32xf32>
    %7 = vector.extract_strided_slice %2 {offsets = [0, 64], sizes = [16, 32], strides = [1, 1]} : vector<16x96xf32> to vector<16x32xf32>
    %8 = vector.shape_cast %7 : vector<16x32xf32> to vector<2x8x32xf32>
    %9 = tpu.iota {dimensions = array<i32: 0>} : vector<8x8xi32>
    %10 = tpu.iota {dimensions = array<i32: 1>} : vector<8x8xi32>
    %11 = arith.cmpi sgt, %10, %9 : vector<8x8xi32>
    %cst_3 = arith.constant -1.000000e+30 : f32
    %cst_4 = arith.constant 0.000000e+00 : f32
    %12 = vector.broadcast %cst_3 : f32 to vector<8x8xf32>
    %13 = vector.broadcast %cst_4 : f32 to vector<8x8xf32>
    %14 = arith.select %11, %12, %13 : vector<8x8xi1>, vector<8x8xf32>
    %15 = vector.shape_cast %14 : vector<8x8xf32> to vector<1x8x8xf32>
    %16 = vector.extract_strided_slice %4 {offsets = [0, 0, 0], sizes = [2, 8, 16], strides = [1, 1, 1]} : vector<2x8x32xf32> to vector<2x8x16xf32>
    %17 = vector.extract_strided_slice %6 {offsets = [0, 0, 0], sizes = [2, 8, 16], strides = [1, 1, 1]} : vector<2x8x32xf32> to vector<2x8x16xf32>
    %18 = vector.extract_strided_slice %8 {offsets = [0, 0, 0], sizes = [2, 8, 16], strides = [1, 1, 1]} : vector<2x8x32xf32> to vector<2x8x16xf32>
    "tpu.trace_start"() <{level = 10 : i32, message = "bqd,bkd->bqk"}> : () -> ()
    %cst_5 = arith.constant dense<0.000000e+00> : vector<2x8x8xf32>
    %19 = tpu.matmul %16, %17, %cst_5 {dimension_numbers = #tpu.dot_dimension_numbers<[2], [2], [1], [1], [0, 0, 0, 1, 1, 1], [0], [0]>} : vector<2x8x16xf32>, vector<2x8x16xf32>, vector<2x8x8xf32> -> vector<2x8x8xf32>
    "tpu.trace_stop"() : () -> ()
    %20 = vector.broadcast %15 : vector<1x8x8xf32> to vector<2x8x8xf32>
    %21 = arith.addf %19, %20 : vector<2x8x8xf32>
    %cst_6 = arith.constant dense<0xFF800000> : vector<2x8xf32>
    %22 = vector.multi_reduction <maximumf>, %21, %cst_6 [2] : vector<2x8x8xf32> to vector<2x8xf32>
    %23 = vector.shape_cast %22 : vector<2x8xf32> to vector<2x8x1xf32>
    %24 = vector.broadcast %23 : vector<2x8x1xf32> to vector<2x8x8xf32>
    %25 = arith.subf %21, %24 : vector<2x8x8xf32>
    %26 = math.exp %25 : vector<2x8x8xf32>
    %cst_7 = arith.constant dense<0.000000e+00> : vector<2x8xf32>
    %27 = vector.multi_reduction <add>, %26, %cst_7 [2] : vector<2x8x8xf32> to vector<2x8xf32>
    %28 = vector.shape_cast %27 : vector<2x8xf32> to vector<2x8x1xf32>
    %29 = tpu.reciprocal %28 {approx = true} : vector<2x8x1xf32> -> vector<2x8x1xf32>
    %30 = arith.mulf %28, %29 : vector<2x8x1xf32>
    %cst_8 = arith.constant 2.000000e+00 : f32
    %31 = vector.broadcast %cst_8 : f32 to vector<2x8x1xf32>
    %32 = arith.subf %31, %30 : vector<2x8x1xf32>
    %33 = arith.mulf %29, %32 : vector<2x8x1xf32>
    %34 = vector.broadcast %33 : vector<2x8x1xf32> to vector<2x8x8xf32>
    %35 = arith.mulf %26, %34 : vector<2x8x8xf32>
    "tpu.trace_start"() <{level = 10 : i32, message = "bqk,bkd->bqd"}> : () -> ()
    %cst_9 = arith.constant dense<0.000000e+00> : vector<2x8x16xf32>
    %36 = tpu.matmul %35, %18, %cst_9 {dimension_numbers = #tpu.dot_dimension_numbers<[2], [1], [1], [2], [0, 0, 0, 1, 1, 2], [0], [0]>} : vector<2x8x8xf32>, vector<2x8x16xf32>, vector<2x8x16xf32> -> vector<2x8x16xf32>
    "tpu.trace_stop"() : () -> ()
    %37 = vector.extract_strided_slice %4 {offsets = [0, 0, 16], sizes = [2, 8, 16], strides = [1, 1, 1]} : vector<2x8x32xf32> to vector<2x8x16xf32>
    %38 = vector.extract_strided_slice %6 {offsets = [0, 0, 16], sizes = [2, 8, 16], strides = [1, 1, 1]} : vector<2x8x32xf32> to vector<2x8x16xf32>
    %39 = vector.extract_strided_slice %8 {offsets = [0, 0, 16], sizes = [2, 8, 16], strides = [1, 1, 1]} : vector<2x8x32xf32> to vector<2x8x16xf32>
    "tpu.trace_start"() <{level = 10 : i32, message = "bqd,bkd->bqk"}> : () -> ()
    %cst_10 = arith.constant dense<0.000000e+00> : vector<2x8x8xf32>
    %40 = tpu.matmul %37, %38, %cst_10 {dimension_numbers = #tpu.dot_dimension_numbers<[2], [2], [1], [1], [0, 0, 0, 1, 1, 1], [0], [0]>} : vector<2x8x16xf32>, vector<2x8x16xf32>, vector<2x8x8xf32> -> vector<2x8x8xf32>
    "tpu.trace_stop"() : () -> ()
    %41 = vector.broadcast %15 : vector<1x8x8xf32> to vector<2x8x8xf32>
    %42 = arith.addf %40, %41 : vector<2x8x8xf32>
    %cst_11 = arith.constant dense<0xFF800000> : vector<2x8xf32>
    %43 = vector.multi_reduction <maximumf>, %42, %cst_11 [2] : vector<2x8x8xf32> to vector<2x8xf32>
    %44 = vector.shape_cast %43 : vector<2x8xf32> to vector<2x8x1xf32>
    %45 = vector.broadcast %44 : vector<2x8x1xf32> to vector<2x8x8xf32>
    %46 = arith.subf %42, %45 : vector<2x8x8xf32>
    %47 = math.exp %46 : vector<2x8x8xf32>
    %cst_12 = arith.constant dense<0.000000e+00> : vector<2x8xf32>
    %48 = vector.multi_reduction <add>, %47, %cst_12 [2] : vector<2x8x8xf32> to vector<2x8xf32>
    %49 = vector.shape_cast %48 : vector<2x8xf32> to vector<2x8x1xf32>
    %50 = tpu.reciprocal %49 {approx = true} : vector<2x8x1xf32> -> vector<2x8x1xf32>
    %51 = arith.mulf %49, %50 : vector<2x8x1xf32>
    %cst_13 = arith.constant 2.000000e+00 : f32
    %52 = vector.broadcast %cst_13 : f32 to vector<2x8x1xf32>
    %53 = arith.subf %52, %51 : vector<2x8x1xf32>
    %54 = arith.mulf %50, %53 : vector<2x8x1xf32>
    %55 = vector.broadcast %54 : vector<2x8x1xf32> to vector<2x8x8xf32>
    %56 = arith.mulf %47, %55 : vector<2x8x8xf32>
    "tpu.trace_start"() <{level = 10 : i32, message = "bqk,bkd->bqd"}> : () -> ()
    %cst_14 = arith.constant dense<0.000000e+00> : vector<2x8x16xf32>
    %57 = tpu.matmul %56, %39, %cst_14 {dimension_numbers = #tpu.dot_dimension_numbers<[2], [1], [1], [2], [0, 0, 0, 1, 1, 2], [0], [0]>} : vector<2x8x8xf32>, vector<2x8x16xf32>, vector<2x8x16xf32> -> vector<2x8x16xf32>
    "tpu.trace_stop"() : () -> ()
    %58 = tpu.concatenate %36, %57 in 2 : vector<2x8x16xf32>, vector<2x8x16xf32> -> vector<2x8x32xf32>
    %c0_15 = arith.constant 0 : index
    %c0_16 = arith.constant 0 : index
    %c0_17 = arith.constant 0 : index
    %59 = vector.load %arg3[%c0_15, %c0_16, %c0_17] : memref<2x8x32xf32, #tpu.memory_space<vmem>>, vector<2x8x32xf32>
    tpu.vector_store %arg3[%c0_15, %c0_16, %c0_17], %58 {strides = array<i32>} : memref<2x8x32xf32, #tpu.memory_space<vmem>>, vector<2x8x32xf32>,
    return
  }
  func.func @transform_0(%arg0: i32) -> (i32, i32) {
    %c0_i32 = arith.constant 0 : i32
    %c0_i32_0 = arith.constant 0 : i32
    %c0_i32_1 = arith.constant 0 : i32
    return %c0_i32, %c0_i32_0 : i32, i32
  }
  func.func @transform_1(%arg0: i32) -> (i32, i32) {
    %c0_i32 = arith.constant 0 : i32
    %c0_i32_0 = arith.constant 0 : i32
    %c0_i32_1 = arith.constant 0 : i32
    return %c0_i32, %c0_i32_0 : i32, i32
  }
  func.func @transform_2(%arg0: i32) -> (i32, i32, i32) {
    %c0_i32 = arith.constant 0 : i32
    %c0_i32_0 = arith.constant 0 : i32
    %c0_i32_1 = arith.constant 0 : i32
    %c0_i32_2 = arith.constant 0 : i32
    return %c0_i32, %c0_i32_0, %c0_i32_1 : i32, i32, i32
  }
}

</mosaic_0001>

<llo_original>
// kernel: tpu_custom_call.1
$region0: #{tpu_custom_call.1}
  #allocation0 [shape = 'u32[]', space=smem, size = 0x4, offset = 0x4, fixed_abs, tag = 'smem constant byte address 0x4 - core index']
  #allocation1 [shape = 'u32[144,128]{1,0:T(1,128)}', space=vmem, size = 0x12000, scoped, tag = 'internal scratch']
  %s0 = inlined_call_operand.hbm [shape: f32[16,32], index: 0, kind: input, shape index: {}]
  %s1 = inlined_call_operand.hbm [shape: f32[32,96], index: 1, kind: input, shape index: {}]
  %s2 = inlined_call_operand.hbm [shape: f32[2,8,32], index: 2, kind: output, shape index: {}]
  %s3 = sld [smem:[#allocation0]]
  $region26: #{tpu_custom_call.1} parent=0
    _
  %s5 = ssub.s32 1, %s3
  %s6 = scalar_select 0, %s5, %s3
  $region1: #{tpu_custom_call.1} parent=0
    #allocation2 [shape = 'u8[8192]{0}', space=vmem, size = 0x2000, scoped, tag = 'input window, operand 0, single buffered']
    #allocation3 [shape = 's32[1]{0}', space=sflag, size = 0x4, scoped, tag = 'scoped memory for tpu_custom_call.1']
    #allocation4 [shape = 's32[1]{0}', space=sflag, size = 0x4, scoped, tag = 'scoped memory for tpu_custom_call.1']
    #allocation5 [shape = 'u8[16384]{0}', space=vmem, size = 0x4000, scoped, tag = 'input window, operand 1, single buffered']
    #allocation6 [shape = 's32[1]{0}', space=sflag, size = 0x4, scoped, tag = 'scoped memory for tpu_custom_call.1']
    #allocation7 [shape = 'u8[8192]{0}', space=vmem, size = 0x2000, scoped, tag = 'output window, operand 0, single buffered']
    %7 = vsyncpa [#allocation3], 0
    %8 = vsyncpa [#allocation6], 0
    %9 = vsyncpa [#allocation4], 0
    // Predicated region
    $region2: #{tpu_custom_call.1} parent=1 // pred_check
      _
    $region3: #{tpu_custom_call.1} parent=1 // pred_check_branch
      %11 = sbr.rel (0) target = $region5
    $region4: #{tpu_custom_call.1} parent=1 // pred_region
      %s13 = ssub.s32 256, 256
      %14 = vsyncadd [#allocation3], %s13
      %s15 = sshll.u32 [#allocation2], 4
      %s16 = int_to_ptr.vmem [resolvable:$true] %s15
      %21 = dma.hbm_to_vmem [thread:$0]  %s0, 256, %s16, [#allocation3], 128, 128, 8
    $region5: #{tpu_custom_call.1} parent=1 // pred_fallthru
      _
    // Predicated region
    $region6: #{tpu_custom_call.1} parent=1 // pred_check
      _
    $region7: #{tpu_custom_call.1} parent=1 // pred_check_branch
      %23 = sbr.rel (0) target = $region9
    $region8: #{tpu_custom_call.1} parent=1 // pred_region
      %s25 = ssub.s32 512, 512
      %26 = vsyncadd [#allocation6], %s25
      %s27 = sshll.u32 [#allocation5], 4
      %s28 = int_to_ptr.vmem [resolvable:$true] %s27
      %33 = dma.hbm_to_vmem [thread:$0]  %s1, 512, %s28, [#allocation6], 128, 128, 8
    $region9: #{tpu_custom_call.1} parent=1 // pred_fallthru
      _
    // Predicated region
    $region10: #{tpu_custom_call.1} parent=1 // pred_check
      _
    $region11: #{tpu_custom_call.1} parent=1 // pred_check_branch
      %35 = sbr.rel (0) target = $region13
    $region12: #{tpu_custom_call.1} parent=1 // pred_region
      %36 = dma.done [#allocation3], 256
    $region13: #{tpu_custom_call.1} parent=1 // pred_fallthru
      _
    // Predicated region
    $region14: #{tpu_custom_call.1} parent=1 // pred_check
      _
    $region15: #{tpu_custom_call.1} parent=1 // pred_check_branch
      %38 = sbr.rel (0) target = $region17
    $region16: #{tpu_custom_call.1} parent=1 // pred_region
      %39 = dma.done [#allocation6], 512
    $region17: #{tpu_custom_call.1} parent=1 // pred_fallthru
      _
    %v40 = vld [vmem:[#allocation2] sm:$0xff]
    %v41 = vld [vmem:[#allocation2 + $0x8] sm:$0xff]
    %v42 = vld [vmem:[#allocation5] sm:$0xff]
    %v43 = vld [vmem:[#allocation5 + $0x8] sm:$0xff]
    %v44 = vld [vmem:[#allocation5 + $0x10] sm:$0xff]
    %v45 = vld [vmem:[#allocation5 + $0x18] sm:$0xff]
    %vm46 = vcmask 261120
    %v48 = vsel %vm46, %v40, 0
    %v51 = vsel %vm46, %v41, 0
    %53 = vmatprep.subr.mxu0 0.0
    %54 = vmatpush1.msra.mxu0 %v42
    %55 = vmatprep.subr.mxu0 0.0
    %56 = vmatpush1.msra.mxu0 %v43
    %57 = vmatprep.subr.mxu0 0.0
    %58 = vmatpush1.msra.mxu0 %v44
    %59 = vmatprep.subr.mxu0 0.0
    %60 = vmatpush1.msra.mxu0 %v45
    %61 = vmatprep.subr.mxu0 0.0
    %62 = vmatpush1.msra.mxu0 0.0
    %63 = vmatprep.subr.mxu0 0.0
    %64 = vmatpush1.msra.mxu0 0.0
    %65 = vmatprep.subr.mxu0 0.0
    %66 = vmatpush1.msra.mxu0 0.0
    %67 = vmatprep.subr.mxu0 0.0
    %68 = vmatpush1.msra.mxu0 0.0
    %69 = vmatprep.subr.mxu0 0.0
    %70 = vmatpush1.msra.mxu0 0.0
    %71 = vmatprep.subr.mxu0 0.0
    %72 = vmatpush1.msra.mxu0 0.0
    %73 = vmatprep.subr.mxu0 0.0
    %74 = vmatpush1.msra.mxu0 0.0
    %75 = vmatprep.subr.mxu0 0.0
    %76 = vmatpush1.msra.mxu0 0.0
    %77 = vmatprep.subr.mxu0 0.0
    %78 = vmatpush1.msra.mxu0 0.0
    %79 = vmatprep.subr.mxu0 0.0
    %80 = vmatpush1.msra.mxu0 0.0
    %81 = vmatprep.subr.mxu0 0.0
    %82 = vmatpush1.msra.mxu0 0.0
    %83 = vmatprep.subr.mxu0 0.0
    %84 = vmatpush1.msra.mxu0 0.0
    %85 = vmatprep.subr.mxu0 0.0
    %86 = vmatpush1.msra.mxu0 0.0
    %87 = vmatprep.subr.mxu0 0.0
    %88 = vmatpush1.msra.mxu0 0.0
    %89 = vmatprep.subr.mxu0 0.0
    %90 = vmatpush1.msra.mxu0 0.0
    %91 = vmatprep.subr.mxu0 0.0
    %92 = vmatpush1.msra.mxu0 0.0
    %93 = vmatprep.subr.mxu0 0.0
    %94 = vmatpush1.msra.mxu0 0.0
    %95 = vmatprep.subr.mxu0 0.0
    %96 = vmatpush1.msra.mxu0 0.0
    %97 = vmatprep.subr.mxu0 0.0
    %98 = vmatpush1.msra.mxu0 0.0
    %99 = vmatprep.subr.mxu0 0.0
    %100 = vmatpush1.msra.mxu0 0.0
    %101 = vmatprep.subr.mxu0 0.0
    %102 = vmatpush1.msra.mxu0 0.0
    %103 = vmatprep.subr.mxu0 0.0
    %104 = vmatpush1.msra.mxu0 0.0
    %105 = vmatprep.subr.mxu0 0.0
    %106 = vmatpush1.msra.mxu0 0.0
    %107 = vmatprep.subr.mxu0 0.0
    %108 = vmatpush1.msra.mxu0 0.0
    %109 = vmatprep.subr.mxu0 0.0
    %110 = vmatpush1.msra.mxu0 0.0
    %111 = vmatprep.subr.mxu0 0.0
    %112 = vmatpush1.msra.mxu0 0.0
    %113 = vmatprep.subr.mxu0 0.0
    %114 = vmatpush1.msra.mxu0 0.0
    %115 = vmatprep.subr.mxu0 0.0
    %116 = vmatpush1.msra.mxu0 0.0
    %117 = vmatprep.mubr.f32.mxu0 0.0
    %118 = vmatmul.mubr.f32.gmra.mrb[0].mxu0 %v48
    %v119 = vpop.f32.mrb[0].mxu0
    %v120 = vadd.f32 0.0, %v119
    %v121 = vpop.f32.mrb[0].mxu0
    %122 = vmatprep.mubr.f32.mxu0 0.0
    %123 = vmatmul.mubr.f32.gmra.mrb[0].mxu0 %v51
    %v124 = vpop.f32.mrb[0].mxu0
    %v125 = vadd.f32 0.0, %v124
    %v126 = vpop.f32.mrb[0].mxu0
    %127 = vdwg.mxu0
    %v128 = vlaneseq
    %v129 = vshrl.u32 %v128, 7
    %v130 = vlaneseq
    %v131 = vand.u32 %v130, 127
    %vm132 = vcmp.gt.s32.totalorder %v131, %v129
    %v133 = vsel %vm132, -1e+30, 0.0
    %135 = vrot.lane.b32.xlu0 %v120, 96
    %v136 = vpop.permute.xlu0 %135
    %vm137 = vcmask 130048
    %v138 = vsel %vm137, %v120, 0
    %v140 = vsel %vm137, %v136, 0
    %142 = vmatprep.subr.mxu0 0.0
    %143 = vmatpush1.xpose.msra.mxu0 %v140
    %144 = vmatprep.subr.mxu0 0.0
    %145 = vmatpush1.xpose.msra.mxu0 0.0
    %146 = vmatprep.subr.mxu0 0.0
    %147 = vmatpush1.xpose.msra.mxu0 0.0
    %148 = vmatprep.subr.mxu0 0.0
    %149 = vmatpush1.xpose.msra.mxu0 0.0
    %150 = vmatprep.subr.mxu0 0.0
    %151 = vmatpush1.xpose.msra.mxu0 0.0
    %152 = vmatprep.subr.mxu0 0.0
    %153 = vmatpush1.xpose.msra.mxu0 0.0
    %154 = vmatprep.subr.mxu0 0.0
    %155 = vmatpush1.xpose.msra.mxu0 0.0
    %156 = vmatprep.subr.mxu0 0.0
    %157 = vmatpush1.xpose.msra.mxu0 0.0
    %158 = vmatprep.subr.mxu0 0.0
    %159 = vmatpush1.xpose.msra.mxu0 0.0
    %160 = vmatprep.subr.mxu0 0.0
    %161 = vmatpush1.xpose.msra.mxu0 0.0
    %162 = vmatprep.subr.mxu0 0.0
    %163 = vmatpush1.xpose.msra.mxu0 0.0
    %164 = vmatprep.subr.mxu0 0.0
    %165 = vmatpush1.xpose.msra.mxu0 0.0
    %166 = vmatprep.subr.mxu0 0.0
    %167 = vmatpush1.xpose.msra.mxu0 0.0
    %168 = vmatprep.subr.mxu0 0.0
    %169 = vmatpush1.xpose.msra.mxu0 0.0
    %170 = vmatprep.subr.mxu0 0.0
    %171 = vmatpush1.xpose.msra.mxu0 0.0
    %172 = vmatprep.subr.mxu0 0.0
    %173 = vmatpush1.xpose.msra.mxu0 0.0
    %174 = vmatprep.subr.mxu0 0.0
    %175 = vmatpush1.xpose.msra.mxu0 0.0
    %176 = vmatprep.subr.mxu0 0.0
    %177 = vmatpush1.xpose.msra.mxu0 0.0
    %178 = vmatprep.subr.mxu0 0.0
    %179 = vmatpush1.xpose.msra.mxu0 0.0
    %180 = vmatprep.subr.mxu0 0.0
    %181 = vmatpush1.xpose.msra.mxu0 0.0
    %182 = vmatprep.subr.mxu0 0.0
    %183 = vmatpush1.xpose.msra.mxu0 0.0
    %184 = vmatprep.subr.mxu0 0.0
    %185 = vmatpush1.xpose.msra.mxu0 0.0
    %186 = vmatprep.subr.mxu0 0.0
    %187 = vmatpush1.xpose.msra.mxu0 0.0
    %188 = vmatprep.subr.mxu0 0.0
    %189 = vmatpush1.xpose.msra.mxu0 0.0
    %190 = vmatprep.subr.mxu0 0.0
    %191 = vmatpush1.xpose.msra.mxu0 0.0
    %192 = vmatprep.subr.mxu0 0.0
    %193 = vmatpush1.xpose.msra.mxu0 0.0
    %194 = vmatprep.subr.mxu0 0.0
    %195 = vmatpush1.xpose.msra.mxu0 0.0
    %196 = vmatprep.subr.mxu0 0.0
    %197 = vmatpush1.xpose.msra.mxu0 0.0
    %198 = vmatprep.subr.mxu0 0.0
    %199 = vmatpush1.xpose.msra.mxu0 0.0
    %200 = vmatprep.subr.mxu0 0.0
    %201 = vmatpush1.xpose.msra.mxu0 0.0
    %202 = vmatprep.subr.mxu0 0.0
    %203 = vmatpush1.xpose.msra.mxu0 0.0
    %204 = vmatprep.subr.mxu0 0.0
    %205 = vmatpush1.xpose.msra.mxu0 0.0
    %206 = vmatprep.mubr.f32.mxu0 0.0
    %207 = vmatmul.mubr.f32.gmra.mrb[0].mxu0 %v138
    %v208 = vpop.f32.mrb[0].mxu0
    %v209 = vadd.f32 %v133, %v208
    %v210 = vpop.f32.mrb[0].mxu0
    %211 = vdwg.mxu0
    %213 = vrot.lane.b32.xlu0 %v125, 96
    %v214 = vpop.permute.xlu0 %213
    %v215 = vsel %vm137, %v125, 0
    %v217 = vsel %vm137, %v214, 0
    %219 = vmatprep.subr.mxu0 0.0
    %220 = vmatpush1.xpose.msra.mxu0 %v217
    %221 = vmatprep.subr.mxu0 0.0
    %222 = vmatpush1.xpose.msra.mxu0 0.0
    %223 = vmatprep.subr.mxu0 0.0
    %224 = vmatpush1.xpose.msra.mxu0 0.0
    %225 = vmatprep.subr.mxu0 0.0
    %226 = vmatpush1.xpose.msra.mxu0 0.0
    %227 = vmatprep.subr.mxu0 0.0
    %228 = vmatpush1.xpose.msra.mxu0 0.0
    %229 = vmatprep.subr.mxu0 0.0
    %230 = vmatpush1.xpose.msra.mxu0 0.0
    %231 = vmatprep.subr.mxu0 0.0
    %232 = vmatpush1.xpose.msra.mxu0 0.0
    %233 = vmatprep.subr.mxu0 0.0
    %234 = vmatpush1.xpose.msra.mxu0 0.0
    %235 = vmatprep.subr.mxu0 0.0
    %236 = vmatpush1.xpose.msra.mxu0 0.0
    %237 = vmatprep.subr.mxu0 0.0
    %238 = vmatpush1.xpose.msra.mxu0 0.0
    %239 = vmatprep.subr.mxu0 0.0
    %240 = vmatpush1.xpose.msra.mxu0 0.0
    %241 = vmatprep.subr.mxu0 0.0
    %242 = vmatpush1.xpose.msra.mxu0 0.0
    %243 = vmatprep.subr.mxu0 0.0
    %244 = vmatpush1.xpose.msra.mxu0 0.0
    %245 = vmatprep.subr.mxu0 0.0
    %246 = vmatpush1.xpose.msra.mxu0 0.0
    %247 = vmatprep.subr.mxu0 0.0
    %248 = vmatpush1.xpose.msra.mxu0 0.0
    %249 = vmatprep.subr.mxu0 0.0
    %250 = vmatpush1.xpose.msra.mxu0 0.0
    %251 = vmatprep.subr.mxu0 0.0
    %252 = vmatpush1.xpose.msra.mxu0 0.0
    %253 = vmatprep.subr.mxu0 0.0
    %254 = vmatpush1.xpose.msra.mxu0 0.0
    %255 = vmatprep.subr.mxu0 0.0
    %256 = vmatpush1.xpose.msra.mxu0 0.0
    %257 = vmatprep.subr.mxu0 0.0
    %258 = vmatpush1.xpose.msra.mxu0 0.0
    %259 = vmatprep.subr.mxu0 0.0
    %260 = vmatpush1.xpose.msra.mxu0 0.0
    %261 = vmatprep.subr.mxu0 0.0
    %262 = vmatpush1.xpose.msra.mxu0 0.0
    %263 = vmatprep.subr.mxu0 0.0
    %264 = vmatpush1.xpose.msra.mxu0 0.0
    %265 = vmatprep.subr.mxu0 0.0
    %266 = vmatpush1.xpose.msra.mxu0 0.0
    %267 = vmatprep.subr.mxu0 0.0
    %268 = vmatpush1.xpose.msra.mxu0 0.0
    %269 = vmatprep.subr.mxu0 0.0
    %270 = vmatpush1.xpose.msra.mxu0 0.0
    %271 = vmatprep.subr.mxu0 0.0
    %272 = vmatpush1.xpose.msra.mxu0 0.0
    %273 = vmatprep.subr.mxu0 0.0
    %274 = vmatpush1.xpose.msra.mxu0 0.0
    %275 = vmatprep.subr.mxu0 0.0
    %276 = vmatpush1.xpose.msra.mxu0 0.0
    %277 = vmatprep.subr.mxu0 0.0
    %278 = vmatpush1.xpose.msra.mxu0 0.0
    %279 = vmatprep.subr.mxu0 0.0
    %280 = vmatpush1.xpose.msra.mxu0 0.0
    %281 = vmatprep.subr.mxu0 0.0
    %282 = vmatpush1.xpose.msra.mxu0 0.0
    %283 = vmatprep.mubr.f32.mxu0 0.0
    %284 = vmatmul.mubr.f32.gmra.mrb[0].mxu0 %v215
    %v285 = vpop.f32.mrb[0].mxu0
    %v286 = vadd.f32 %v133, %v285
    %v287 = vpop.f32.mrb[0].mxu0
    %288 = vdwg.mxu0
    %vm289 = vcmask 64512
    %v290 = vsel %vm289, %v209, -inf
    %291 = vmax.xlane.f32.xlu0 %v290
    %v292 = vpop.xlane.xlu0 %291
    %v293 = vsel %vm289, %v286, -inf
    %294 = vmax.xlane.f32.xlu0 %v293
    %v295 = vpop.xlane.xlu0 %294
    %v296 = vsub.f32 %v209, %v292
    %v297 = vsub.f32 %v286, %v295
    %v298 = vmul.f32 %v296, 1.442695
    %v299 = vpow.pop %v298
    %v300 = vmul.f32 %v297, 1.442695
    %v301 = vpow.pop %v300
    %v302 = vsel %vm289, %v299, 0.0
    %303 = vadd.xlane.f32.xlu0 %v302
    %v304 = vpop.xlane.xlu0 %303
    %v305 = vsel %vm289, %v301, 0.0
    %306 = vadd.xlane.f32.xlu0 %v305
    %v307 = vpop.xlane.xlu0 %306
    %v308 = vrcp.pop %v304
    %v309 = vrcp.pop %v307
    %v310 = vmul.f32 %v304, %v308
    %v311 = vmul.f32 %v307, %v309
    %v312 = vsub.f32 2.0, %v310
    %v313 = vsub.f32 2.0, %v311
    %v314 = vmul.f32 %v308, %v312
    %v315 = vmul.f32 %v309, %v313
    %v316 = vmul.f32 %v299, %v314
    %v317 = vmul.f32 %v301, %v315
    %318 = vrot.lane.b32.xlu0 %v120, 64
    %v319 = vpop.permute.xlu0 %318
    %v322 = vsel %vm289, %v316, 0
    %324 = vmatprep.subr.mxu0 0.0
    %325 = vmatpush1.msra.mxu0 %v319
    %326 = vmatprep.subr.mxu0 0.0
    %327 = vmatpush1.msra.mxu0 0.0
    %328 = vmatprep.subr.mxu0 0.0
    %329 = vmatpush1.msra.mxu0 0.0
    %330 = vmatprep.subr.mxu0 0.0
    %331 = vmatpush1.msra.mxu0 0.0
    %332 = vmatprep.subr.mxu0 0.0
    %333 = vmatpush1.msra.mxu0 0.0
    %334 = vmatprep.subr.mxu0 0.0
    %335 = vmatpush1.msra.mxu0 0.0
    %336 = vmatprep.subr.mxu0 0.0
    %337 = vmatpush1.msra.mxu0 0.0
    %338 = vmatprep.subr.mxu0 0.0
    %339 = vmatpush1.msra.mxu0 0.0
    %340 = vmatprep.subr.mxu0 0.0
    %341 = vmatpush1.msra.mxu0 0.0
    %342 = vmatprep.subr.mxu0 0.0
    %343 = vmatpush1.msra.mxu0 0.0
    %344 = vmatprep.subr.mxu0 0.0
    %345 = vmatpush1.msra.mxu0 0.0
    %346 = vmatprep.subr.mxu0 0.0
    %347 = vmatpush1.msra.mxu0 0.0
    %348 = vmatprep.subr.mxu0 0.0
    %349 = vmatpush1.msra.mxu0 0.0
    %350 = vmatprep.subr.mxu0 0.0
    %351 = vmatpush1.msra.mxu0 0.0
    %352 = vmatprep.subr.mxu0 0.0
    %353 = vmatpush1.msra.mxu0 0.0
    %354 = vmatprep.subr.mxu0 0.0
    %355 = vmatpush1.msra.mxu0 0.0
    %356 = vmatprep.subr.mxu0 0.0
    %357 = vmatpush1.msra.mxu0 0.0
    %358 = vmatprep.subr.mxu0 0.0
    %359 = vmatpush1.msra.mxu0 0.0
    %360 = vmatprep.subr.mxu0 0.0
    %361 = vmatpush1.msra.mxu0 0.0
    %362 = vmatprep.subr.mxu0 0.0
    %363 = vmatpush1.msra.mxu0 0.0
    %364 = vmatprep.subr.mxu0 0.0
    %365 = vmatpush1.msra.mxu0 0.0
    %366 = vmatprep.subr.mxu0 0.0
    %367 = vmatpush1.msra.mxu0 0.0
    %368 = vmatprep.subr.mxu0 0.0
    %369 = vmatpush1.msra.mxu0 0.0
    %370 = vmatprep.subr.mxu0 0.0
    %371 = vmatpush1.msra.mxu0 0.0
    %372 = vmatprep.subr.mxu0 0.0
    %373 = vmatpush1.msra.mxu0 0.0
    %374 = vmatprep.subr.mxu0 0.0
    %375 = vmatpush1.msra.mxu0 0.0
    %376 = vmatprep.subr.mxu0 0.0
    %377 = vmatpush1.msra.mxu0 0.0
    %378 = vmatprep.subr.mxu0 0.0
    %379 = vmatpush1.msra.mxu0 0.0
    %380 = vmatprep.subr.mxu0 0.0
    %381 = vmatpush1.msra.mxu0 0.0
    %382 = vmatprep.subr.mxu0 0.0
    %383 = vmatpush1.msra.mxu0 0.0
    %384 = vmatprep.subr.mxu0 0.0
    %385 = vmatpush1.msra.mxu0 0.0
    %386 = vmatprep.subr.mxu0 0.0
    %387 = vmatpush1.msra.mxu0 0.0
    %388 = vmatprep.mubr.f32.mxu0 0.0
    %389 = vmatmul.mubr.f32.gmra.mrb[0].mxu0 %v322
    %v390 = vpop.f32.mrb[0].mxu0
    %v391 = vadd.f32 0.0, %v390
    %v392 = vpop.f32.mrb[0].mxu0
    %393 = vdwg.mxu0
    %394 = vrot.lane.b32.xlu0 %v125, 64
    %v395 = vpop.permute.xlu0 %394
    %v398 = vsel %vm289, %v317, 0
    %400 = vmatprep.subr.mxu0 0.0
    %401 = vmatpush1.msra.mxu0 %v395
    %402 = vmatprep.subr.mxu0 0.0
    %403 = vmatpush1.msra.mxu0 0.0
    %404 = vmatprep.subr.mxu0 0.0
    %405 = vmatpush1.msra.mxu0 0.0
    %406 = vmatprep.subr.mxu0 0.0
    %407 = vmatpush1.msra.mxu0 0.0
    %408 = vmatprep.subr.mxu0 0.0
    %409 = vmatpush1.msra.mxu0 0.0
    %410 = vmatprep.subr.mxu0 0.0
    %411 = vmatpush1.msra.mxu0 0.0
    %412 = vmatprep.subr.mxu0 0.0
    %413 = vmatpush1.msra.mxu0 0.0
    %414 = vmatprep.subr.mxu0 0.0
    %415 = vmatpush1.msra.mxu0 0.0
    %416 = vmatprep.subr.mxu0 0.0
    %417 = vmatpush1.msra.mxu0 0.0
    %418 = vmatprep.subr.mxu0 0.0
    %419 = vmatpush1.msra.mxu0 0.0
    %420 = vmatprep.subr.mxu0 0.0
    %421 = vmatpush1.msra.mxu0 0.0
    %422 = vmatprep.subr.mxu0 0.0
    %423 = vmatpush1.msra.mxu0 0.0
    %424 = vmatprep.subr.mxu0 0.0
    %425 = vmatpush1.msra.mxu0 0.0
    %426 = vmatprep.subr.mxu0 0.0
    %427 = vmatpush1.msra.mxu0 0.0
    %428 = vmatprep.subr.mxu0 0.0
    %429 = vmatpush1.msra.mxu0 0.0
    %430 = vmatprep.subr.mxu0 0.0
    %431 = vmatpush1.msra.mxu0 0.0
    %432 = vmatprep.subr.mxu0 0.0
    %433 = vmatpush1.msra.mxu0 0.0
    %434 = vmatprep.subr.mxu0 0.0
    %435 = vmatpush1.msra.mxu0 0.0
    %436 = vmatprep.subr.mxu0 0.0
    %437 = vmatpush1.msra.mxu0 0.0
    %438 = vmatprep.subr.mxu0 0.0
    %439 = vmatpush1.msra.mxu0 0.0
    %440 = vmatprep.subr.mxu0 0.0
    %441 = vmatpush1.msra.mxu0 0.0
    %442 = vmatprep.subr.mxu0 0.0
    %443 = vmatpush1.msra.mxu0 0.0
    %444 = vmatprep.subr.mxu0 0.0
    %445 = vmatpush1.msra.mxu0 0.0
    %446 = vmatprep.subr.mxu0 0.0
    %447 = vmatpush1.msra.mxu0 0.0
    %448 = vmatprep.subr.mxu0 0.0
    %449 = vmatpush1.msra.mxu0 0.0
    %450 = vmatprep.subr.mxu0 0.0
    %451 = vmatpush1.msra.mxu0 0.0
    %452 = vmatprep.subr.mxu0 0.0
    %453 = vmatpush1.msra.mxu0 0.0
    %454 = vmatprep.subr.mxu0 0.0
    %455 = vmatpush1.msra.mxu0 0.0
    %456 = vmatprep.subr.mxu0 0.0
    %457 = vmatpush1.msra.mxu0 0.0
    %458 = vmatprep.subr.mxu0 0.0
    %459 = vmatpush1.msra.mxu0 0.0
    %460 = vmatprep.subr.mxu0 0.0
    %461 = vmatpush1.msra.mxu0 0.0
    %462 = vmatprep.subr.mxu0 0.0
    %463 = vmatpush1.msra.mxu0 0.0
    %464 = vmatprep.mubr.f32.mxu0 0.0
    %465 = vmatmul.mubr.f32.gmra.mrb[0].mxu0 %v398
    %v466 = vpop.f32.mrb[0].mxu0
    %v467 = vadd.f32 0.0, %v466
    %v468 = vpop.f32.mrb[0].mxu0
    %469 = vdwg.mxu0
    %470 = vrot.lane.b32.xlu0 %v120, 112
    %v471 = vpop.permute.xlu0 %470
    %472 = vrot.lane.b32.xlu0 %v120, 80
    %v473 = vpop.permute.xlu0 %472
    %v474 = vsel %vm137, %v471, 0
    %v476 = vsel %vm137, %v473, 0
    %478 = vmatprep.subr.mxu0 0.0
    %479 = vmatpush1.xpose.msra.mxu0 %v476
    %480 = vmatprep.subr.mxu0 0.0
    %481 = vmatpush1.xpose.msra.mxu0 0.0
    %482 = vmatprep.subr.mxu0 0.0
    %483 = vmatpush1.xpose.msra.mxu0 0.0
    %484 = vmatprep.subr.mxu0 0.0
    %485 = vmatpush1.xpose.msra.mxu0 0.0
    %486 = vmatprep.subr.mxu0 0.0
    %487 = vmatpush1.xpose.msra.mxu0 0.0
    %488 = vmatprep.subr.mxu0 0.0
    %489 = vmatpush1.xpose.msra.mxu0 0.0
    %490 = vmatprep.subr.mxu0 0.0
    %491 = vmatpush1.xpose.msra.mxu0 0.0
    %492 = vmatprep.subr.mxu0 0.0
    %493 = vmatpush1.xpose.msra.mxu0 0.0
    %494 = vmatprep.subr.mxu0 0.0
    %495 = vmatpush1.xpose.msra.mxu0 0.0
    %496 = vmatprep.subr.mxu0 0.0
    %497 = vmatpush1.xpose.msra.mxu0 0.0
    %498 = vmatprep.subr.mxu0 0.0
    %499 = vmatpush1.xpose.msra.mxu0 0.0
    %500 = vmatprep.subr.mxu0 0.0
    %501 = vmatpush1.xpose.msra.mxu0 0.0
    %502 = vmatprep.subr.mxu0 0.0
    %503 = vmatpush1.xpose.msra.mxu0 0.0
    %504 = vmatprep.subr.mxu0 0.0
    %505 = vmatpush1.xpose.msra.mxu0 0.0
    %506 = vmatprep.subr.mxu0 0.0
    %507 = vmatpush1.xpose.msra.mxu0 0.0
    %508 = vmatprep.subr.mxu0 0.0
    %509 = vmatpush1.xpose.msra.mxu0 0.0
    %510 = vmatprep.subr.mxu0 0.0
    %511 = vmatpush1.xpose.msra.mxu0 0.0
    %512 = vmatprep.subr.mxu0 0.0
    %513 = vmatpush1.xpose.msra.mxu0 0.0
    %514 = vmatprep.subr.mxu0 0.0
    %515 = vmatpush1.xpose.msra.mxu0 0.0
    %516 = vmatprep.subr.mxu0 0.0
    %517 = vmatpush1.xpose.msra.mxu0 0.0
    %518 = vmatprep.subr.mxu0 0.0
    %519 = vmatpush1.xpose.msra.mxu0 0.0
    %520 = vmatprep.subr.mxu0 0.0
    %521 = vmatpush1.xpose.msra.mxu0 0.0
    %522 = vmatprep.subr.mxu0 0.0
    %523 = vmatpush1.xpose.msra.mxu0 0.0
    %524 = vmatprep.subr.mxu0 0.0
    %525 = vmatpush1.xpose.msra.mxu0 0.0
    %526 = vmatprep.subr.mxu0 0.0
    %527 = vmatpush1.xpose.msra.mxu0 0.0
    %528 = vmatprep.subr.mxu0 0.0
    %529 = vmatpush1.xpose.msra.mxu0 0.0
    %530 = vmatprep.subr.mxu0 0.0
    %531 = vmatpush1.xpose.msra.mxu0 0.0
    %532 = vmatprep.subr.mxu0 0.0
    %533 = vmatpush1.xpose.msra.mxu0 0.0
    %534 = vmatprep.subr.mxu0 0.0
    %535 = vmatpush1.xpose.msra.mxu0 0.0
    %536 = vmatprep.subr.mxu0 0.0
    %537 = vmatpush1.xpose.msra.mxu0 0.0
    %538 = vmatprep.subr.mxu0 0.0
    %539 = vmatpush1.xpose.msra.mxu0 0.0
    %540 = vmatprep.subr.mxu0 0.0
    %541 = vmatpush1.xpose.msra.mxu0 0.0
    %542 = vmatprep.mubr.f32.mxu0 0.0
    %543 = vmatmul.mubr.f32.gmra.mrb[0].mxu0 %v474
    %v544 = vpop.f32.mrb[0].mxu0
    %v545 = vadd.f32 %v133, %v544
    %v546 = vpop.f32.mrb[0].mxu0
    %547 = vdwg.mxu0
    %548 = vrot.lane.b32.xlu0 %v125, 112
    %v549 = vpop.permute.xlu0 %548
    %550 = vrot.lane.b32.xlu0 %v125, 80
    %v551 = vpop.permute.xlu0 %550
    %v552 = vsel %vm137, %v549, 0
    %v554 = vsel %vm137, %v551, 0
    %556 = vmatprep.subr.mxu0 0.0
    %557 = vmatpush1.xpose.msra.mxu0 %v554
    %558 = vmatprep.subr.mxu0 0.0
    %559 = vmatpush1.xpose.msra.mxu0 0.0
    %560 = vmatprep.subr.mxu0 0.0
    %561 = vmatpush1.xpose.msra.mxu0 0.0
    %562 = vmatprep.subr.mxu0 0.0
    %563 = vmatpush1.xpose.msra.mxu0 0.0
    %564 = vmatprep.subr.mxu0 0.0
    %565 = vmatpush1.xpose.msra.mxu0 0.0
    %566 = vmatprep.subr.mxu0 0.0
    %567 = vmatpush1.xpose.msra.mxu0 0.0
    %568 = vmatprep.subr.mxu0 0.0
    %569 = vmatpush1.xpose.msra.mxu0 0.0
    %570 = vmatprep.subr.mxu0 0.0
    %571 = vmatpush1.xpose.msra.mxu0 0.0
    %572 = vmatprep.subr.mxu0 0.0
    %573 = vmatpush1.xpose.msra.mxu0 0.0
    %574 = vmatprep.subr.mxu0 0.0
    %575 = vmatpush1.xpose.msra.mxu0 0.0
    %576 = vmatprep.subr.mxu0 0.0
    %577 = vmatpush1.xpose.msra.mxu0 0.0
    %578 = vmatprep.subr.mxu0 0.0
    %579 = vmatpush1.xpose.msra.mxu0 0.0
    %580 = vmatprep.subr.mxu0 0.0
    %581 = vmatpush1.xpose.msra.mxu0 0.0
    %582 = vmatprep.subr.mxu0 0.0
    %583 = vmatpush1.xpose.msra.mxu0 0.0
    %584 = vmatprep.subr.mxu0 0.0
    %585 = vmatpush1.xpose.msra.mxu0 0.0
    %586 = vmatprep.subr.mxu0 0.0
    %587 = vmatpush1.xpose.msra.mxu0 0.0
    %588 = vmatprep.subr.mxu0 0.0
    %589 = vmatpush1.xpose.msra.mxu0 0.0
    %590 = vmatprep.subr.mxu0 0.0
    %591 = vmatpush1.xpose.msra.mxu0 0.0
    %592 = vmatprep.subr.mxu0 0.0
    %593 = vmatpush1.xpose.msra.mxu0 0.0
    %594 = vmatprep.subr.mxu0 0.0
    %595 = vmatpush1.xpose.msra.mxu0 0.0
    %596 = vmatprep.subr.mxu0 0.0
    %597 = vmatpush1.xpose.msra.mxu0 0.0
    %598 = vmatprep.subr.mxu0 0.0
    %599 = vmatpush1.xpose.msra.mxu0 0.0
    %600 = vmatprep.subr.mxu0 0.0
    %601 = vmatpush1.xpose.msra.mxu0 0.0
    %602 = vmatprep.subr.mxu0 0.0
    %603 = vmatpush1.xpose.msra.mxu0 0.0
    %604 = vmatprep.subr.mxu0 0.0
    %605 = vmatpush1.xpose.msra.mxu0 0.0
    %606 = vmatprep.subr.mxu0 0.0
    %607 = vmatpush1.xpose.msra.mxu0 0.0
    %608 = vmatprep.subr.mxu0 0.0
    %609 = vmatpush1.xpose.msra.mxu0 0.0
    %610 = vmatprep.subr.mxu0 0.0
    %611 = vmatpush1.xpose.msra.mxu0 0.0
    %612 = vmatprep.subr.mxu0 0.0
    %613 = vmatpush1.xpose.msra.mxu0 0.0
    %614 = vmatprep.subr.mxu0 0.0
    %615 = vmatpush1.xpose.msra.mxu0 0.0
    %616 = vmatprep.subr.mxu0 0.0
    %617 = vmatpush1.xpose.msra.mxu0 0.0
    %618 = vmatprep.subr.mxu0 0.0
    %619 = vmatpush1.xpose.msra.mxu0 0.0
    %620 = vmatprep.mubr.f32.mxu0 0.0
    %621 = vmatmul.mubr.f32.gmra.mrb[0].mxu0 %v552
    %v622 = vpop.f32.mrb[0].mxu0
    %v623 = vadd.f32 %v133, %v622
    %v624 = vpop.f32.mrb[0].mxu0
    %625 = vdwg.mxu0
    %v626 = vsel %vm289, %v545, -inf
    %627 = vmax.xlane.f32.xlu0 %v626
    %v628 = vpop.xlane.xlu0 %627
    %v629 = vsel %vm289, %v623, -inf
    %630 = vmax.xlane.f32.xlu0 %v629
    %v631 = vpop.xlane.xlu0 %630
    %v632 = vsub.f32 %v545, %v628
    %v633 = vsub.f32 %v623, %v631
    %v634 = vmul.f32 %v632, 1.442695
    %v635 = vpow.pop %v634
    %v636 = vmul.f32 %v633, 1.442695
    %v637 = vpow.pop %v636
    %v638 = vsel %vm289, %v635, 0.0
    %639 = vadd.xlane.f32.xlu0 %v638
    %v640 = vpop.xlane.xlu0 %639
    %v641 = vsel %vm289, %v637, 0.0
    %642 = vadd.xlane.f32.xlu0 %v641
    %v643 = vpop.xlane.xlu0 %642
    %v644 = vrcp.pop %v640
    %v645 = vrcp.pop %v643
    %v646 = vmul.f32 %v640, %v644
    %v647 = vmul.f32 %v643, %v645
    %v648 = vsub.f32 2.0, %v646
    %v649 = vsub.f32 2.0, %v647
    %v650 = vmul.f32 %v644, %v648
    %v651 = vmul.f32 %v645, %v649
    %v652 = vmul.f32 %v635, %v650
    %v653 = vmul.f32 %v637, %v651
    %654 = vrot.lane.b32.xlu0 %v120, 48
    %v655 = vpop.permute.xlu0 %654
    %v658 = vsel %vm289, %v652, 0
    %660 = vmatprep.subr.mxu0 0.0
    %661 = vmatpush1.msra.mxu0 %v655
    %662 = vmatprep.subr.mxu0 0.0
    %663 = vmatpush1.msra.mxu0 0.0
    %664 = vmatprep.subr.mxu0 0.0
    %665 = vmatpush1.msra.mxu0 0.0
    %666 = vmatprep.subr.mxu0 0.0
    %667 = vmatpush1.msra.mxu0 0.0
    %668 = vmatprep.subr.mxu0 0.0
    %669 = vmatpush1.msra.mxu0 0.0
    %670 = vmatprep.subr.mxu0 0.0
    %671 = vmatpush1.msra.mxu0 0.0
    %672 = vmatprep.subr.mxu0 0.0
    %673 = vmatpush1.msra.mxu0 0.0
    %674 = vmatprep.subr.mxu0 0.0
    %675 = vmatpush1.msra.mxu0 0.0
    %676 = vmatprep.subr.mxu0 0.0
    %677 = vmatpush1.msra.mxu0 0.0
    %678 = vmatprep.subr.mxu0 0.0
    %679 = vmatpush1.msra.mxu0 0.0
    %680 = vmatprep.subr.mxu0 0.0
    %681 = vmatpush1.msra.mxu0 0.0
    %682 = vmatprep.subr.mxu0 0.0
    %683 = vmatpush1.msra.mxu0 0.0
    %684 = vmatprep.subr.mxu0 0.0
    %685 = vmatpush1.msra.mxu0 0.0
    %686 = vmatprep.subr.mxu0 0.0
    %687 = vmatpush1.msra.mxu0 0.0
    %688 = vmatprep.subr.mxu0 0.0
    %689 = vmatpush1.msra.mxu0 0.0
    %690 = vmatprep.subr.mxu0 0.0
    %691 = vmatpush1.msra.mxu0 0.0
    %692 = vmatprep.subr.mxu0 0.0
    %693 = vmatpush1.msra.mxu0 0.0
    %694 = vmatprep.subr.mxu0 0.0
    %695 = vmatpush1.msra.mxu0 0.0
    %696 = vmatprep.subr.mxu0 0.0
    %697 = vmatpush1.msra.mxu0 0.0
    %698 = vmatprep.subr.mxu0 0.0
    %699 = vmatpush1.msra.mxu0 0.0
    %700 = vmatprep.subr.mxu0 0.0
    %701 = vmatpush1.msra.mxu0 0.0
    %702 = vmatprep.subr.mxu0 0.0
    %703 = vmatpush1.msra.mxu0 0.0
    %704 = vmatprep.subr.mxu0 0.0
    %705 = vmatpush1.msra.mxu0 0.0
    %706 = vmatprep.subr.mxu0 0.0
    %707 = vmatpush1.msra.mxu0 0.0
    %708 = vmatprep.subr.mxu0 0.0
    %709 = vmatpush1.msra.mxu0 0.0
    %710 = vmatprep.subr.mxu0 0.0
    %711 = vmatpush1.msra.mxu0 0.0
    %712 = vmatprep.subr.mxu0 0.0
    %713 = vmatpush1.msra.mxu0 0.0
    %714 = vmatprep.subr.mxu0 0.0
    %715 = vmatpush1.msra.mxu0 0.0
    %716 = vmatprep.subr.mxu0 0.0
    %717 = vmatpush1.msra.mxu0 0.0
    %718 = vmatprep.subr.mxu0 0.0
    %719 = vmatpush1.msra.mxu0 0.0
    %720 = vmatprep.subr.mxu0 0.0
    %721 = vmatpush1.msra.mxu0 0.0
    %722 = vmatprep.subr.mxu0 0.0
    %723 = vmatpush1.msra.mxu0 0.0
    %724 = vmatprep.mubr.f32.mxu0 0.0
    %725 = vmatmul.mubr.f32.gmra.mrb[0].mxu0 %v658
    %v726 = vpop.f32.mrb[0].mxu0
    %v727 = vadd.f32 0.0, %v726
    %v728 = vpop.f32.mrb[0].mxu0
    %729 = vdwg.mxu0
    %730 = vrot.lane.b32.xlu0 %v125, 48
    %v731 = vpop.permute.xlu0 %730
    %v734 = vsel %vm289, %v653, 0
    %736 = vmatprep.subr.mxu0 0.0
    %737 = vmatpush1.msra.mxu0 %v731
    %738 = vmatprep.subr.mxu0 0.0
    %739 = vmatpush1.msra.mxu0 0.0
    %740 = vmatprep.subr.mxu0 0.0
    %741 = vmatpush1.msra.mxu0 0.0
    %742 = vmatprep.subr.mxu0 0.0
    %743 = vmatpush1.msra.mxu0 0.0
    %744 = vmatprep.subr.mxu0 0.0
    %745 = vmatpush1.msra.mxu0 0.0
    %746 = vmatprep.subr.mxu0 0.0
    %747 = vmatpush1.msra.mxu0 0.0
    %748 = vmatprep.subr.mxu0 0.0
    %749 = vmatpush1.msra.mxu0 0.0
    %750 = vmatprep.subr.mxu0 0.0
    %751 = vmatpush1.msra.mxu0 0.0
    %752 = vmatprep.subr.mxu0 0.0
    %753 = vmatpush1.msra.mxu0 0.0
    %754 = vmatprep.subr.mxu0 0.0
    %755 = vmatpush1.msra.mxu0 0.0
    %756 = vmatprep.subr.mxu0 0.0
    %757 = vmatpush1.msra.mxu0 0.0
    %758 = vmatprep.subr.mxu0 0.0
    %759 = vmatpush1.msra.mxu0 0.0
    %760 = vmatprep.subr.mxu0 0.0
    %761 = vmatpush1.msra.mxu0 0.0
    %762 = vmatprep.subr.mxu0 0.0
    %763 = vmatpush1.msra.mxu0 0.0
    %764 = vmatprep.subr.mxu0 0.0
    %765 = vmatpush1.msra.mxu0 0.0
    %766 = vmatprep.subr.mxu0 0.0
    %767 = vmatpush1.msra.mxu0 0.0
    %768 = vmatprep.subr.mxu0 0.0
    %769 = vmatpush1.msra.mxu0 0.0
    %770 = vmatprep.subr.mxu0 0.0
    %771 = vmatpush1.msra.mxu0 0.0
    %772 = vmatprep.subr.mxu0 0.0
    %773 = vmatpush1.msra.mxu0 0.0
    %774 = vmatprep.subr.mxu0 0.0
    %775 = vmatpush1.msra.mxu0 0.0
    %776 = vmatprep.subr.mxu0 0.0
    %777 = vmatpush1.msra.mxu0 0.0
    %778 = vmatprep.subr.mxu0 0.0
    %779 = vmatpush1.msra.mxu0 0.0
    %780 = vmatprep.subr.mxu0 0.0
    %781 = vmatpush1.msra.mxu0 0.0
    %782 = vmatprep.subr.mxu0 0.0
    %783 = vmatpush1.msra.mxu0 0.0
    %784 = vmatprep.subr.mxu0 0.0
    %785 = vmatpush1.msra.mxu0 0.0
    %786 = vmatprep.subr.mxu0 0.0
    %787 = vmatpush1.msra.mxu0 0.0
    %788 = vmatprep.subr.mxu0 0.0
    %789 = vmatpush1.msra.mxu0 0.0
    %790 = vmatprep.subr.mxu0 0.0
    %791 = vmatpush1.msra.mxu0 0.0
    %792 = vmatprep.subr.mxu0 0.0
    %793 = vmatpush1.msra.mxu0 0.0
    %794 = vmatprep.subr.mxu0 0.0
    %795 = vmatpush1.msra.mxu0 0.0
    %796 = vmatprep.subr.mxu0 0.0
    %797 = vmatpush1.msra.mxu0 0.0
    %798 = vmatprep.subr.mxu0 0.0
    %799 = vmatpush1.msra.mxu0 0.0
    %800 = vmatprep.mubr.f32.mxu0 0.0
    %801 = vmatmul.mubr.f32.gmra.mrb[0].mxu0 %v734
    %v802 = vpop.f32.mrb[0].mxu0
    %v803 = vadd.f32 0.0, %v802
    %v804 = vpop.f32.mrb[0].mxu0
    %805 = vdwg.mxu0
    %808 = vrot.lane.b32.xlu0 %v727, 16
    %v809 = vpop.permute.xlu0 %808
    %810 = vrot.lane.b32.xlu0 %v803, 16
    %v811 = vpop.permute.xlu0 %810
    %v814 = vsel %vm137, %v391, %v809
    %v815 = vsel %vm137, %v467, %v811
    %816 = vst.msk [vmem:[#allocation7] sm:$0xff] %vm46, %v814
    %817 = vst.msk [vmem:[#allocation7 + $0x8] sm:$0xff] %vm46, %v815
    // Predicated region
    $region18: #{tpu_custom_call.1} parent=1 // pred_check
      _
    $region19: #{tpu_custom_call.1} parent=1 // pred_check_branch
      %819 = sbr.rel (0) target = $region21
    $region20: #{tpu_custom_call.1} parent=1 // pred_region
      %s821 = ssub.s32 256, 256
      %822 = vsyncadd [#allocation4], %s821
      %s823 = sshll.u32 [#allocation7], 4
      %s824 = int_to_ptr.vmem [resolvable:$true] %s823
      %829 = dma.vmem_to_hbm [thread:$0]  %s824, 256, %s2, [#allocation4], 128, 128, 8
    $region21: #{tpu_custom_call.1} parent=1 // pred_fallthru
      _
    // Predicated region
    $region22: #{tpu_custom_call.1} parent=1 // pred_check
      _
    $region23: #{tpu_custom_call.1} parent=1 // pred_check_branch
      %831 = sbr.rel (0) target = $region25
    $region24: #{tpu_custom_call.1} parent=1 // pred_region
      %832 = dma.done [#allocation4], 256
    $region25: #{tpu_custom_call.1} parent=1 // pred_fallthru
      _
    %833 = vsyncpa [#allocation3], 1
    %834 = vsyncpa [#allocation6], 1
    %835 = vsyncpa [#allocation4], 1

</llo_original>
